<compile_context>
chip_gen: v5e
topology: v5e:2x2
jax: 0.10.0
libtpu: 0.0.40
codegen_flags: <defaults>
</compile_context>

<pallas_src>
import functools

import jax
import jax.numpy as jnp
from jax.experimental import pallas as pl
from jax.experimental.pallas import tpu as pltpu


def _round_up(x, m):
    return ((x + m - 1) // m) * m


def _dwsc_kernel(x_ref, dww_ref, dwb_ref, pww_ref, pwb_ref, o_ref, *, K, W, Lout):
    """One (folded) batch group per grid step; channels on sublanes, flattened
    spatial on lanes, output kept in padded row layout (row stride W).

    x_ref   : (1, Nb*Cin, Lp)         input, lanes zero-padded to Lp
    dww_ref : (Nb*Cin, K*K)           depthwise weights, tiled per folded batch
    dwb_ref : (Nb*Cin, 1)             depthwise bias, tiled per folded batch
    pww_ref : (Nb*Cout, Nb*Cin)       block-diagonal pointwise 1x1 weights
    pwb_ref : (Nb*Cout, 1)            pointwise bias, tiled per folded batch
    o_ref   : (1, Nb*Cout, Lout)      Lout = round_up(H_out*W, 128)
    """
    x = x_ref[0]                       # (NbCin, Lp) f32
    dww = dww_ref[...]                 # (NbCin, K*K)

    # ---- depthwise KxK conv (stride 1, valid), padded-row layout ------------
    # acc[:, i*W + j] = sum_{kh,kw} x[:, (i+kh)*W + (j+kw)] * w[:, kh*K+kw]
    # Lanes outside the valid (i < H_out, j < W_out) set hold junk computed
    # from the zero padding; the wrapper slices them away.
    acc = x[:, 0:Lout] * dww[:, 0:1]
    for kh in range(K):
        for kw in range(K):
            t = kh * K + kw
            if t == 0:
                continue
            s = kh * W + kw
            acc = acc + x[:, s:s + Lout] * dww[:, t:t + 1]
    acc = jnp.maximum(acc + dwb_ref[...], 0.0)            # (NbCin, Lout), ReLU

    # ---- pointwise 1x1 conv: one tiny matmul on the idle MXU ----------------
    y = jnp.dot(pww_ref[...], acc, preferred_element_type=jnp.float32)
    y = jnp.maximum(y + pwb_ref[...], 0.0)                # (NbCout, Lout), ReLU

    o_ref[0] = y.astype(o_ref.dtype)                      # unmasked lane-dense vst


def multi_stream_dwsc(x_nchw, dw_w, dw_b, pw_w, pw_b, *, kernel_size=2,
                      stride=1, padding=0, batch_block=None):
    """Forward pass of multi_stream_DWSC.

    x_nchw : (N, Cin, H, W) float32 (PyTorch layout)
    dw_w   : (Cin, K, K)   depthwise weights
    dw_b   : (Cin,)        depthwise bias
    pw_w   : (Cout, Cin)   pointwise (1x1 conv) weights
    pw_b   : (Cout,)       pointwise bias
    batch_block : how many batch elements to fold into one grid step
                  (default: fill the 8 f32 sublanes; pass 1 on v7x to keep
                  >=2 parallel grid steps for its 2 TensorCores).
    Returns (N, Cout, H_out, W_out) float32.
    """
    assert stride == 1 and padding == 0, "implemented for stride=1, padding=0"
    N, Cin, H, W = x_nchw.shape
    K = kernel_size
    Cout = pw_w.shape[0]
    H_out = H - K + 1
    W_out = W - K + 1
    L = H * W

    # --- batch folding factor: fill the 8 f32 sublanes, must divide N --------
    if batch_block is None:
        batch_block = max(1, 8 // max(Cin, 1))
        while N % batch_block != 0:
            batch_block -= 1
    Nb = batch_block
    assert N % Nb == 0
    G = N // Nb                                   # grid size

    # --- lane extents ---------------------------------------------------------
    Lout = _round_up(H_out * W, 128)              # padded-row output extent
    Lp = _round_up(Lout + (K - 1) * W + (K - 1), 128)   # input extent needed
    assert Lp >= L

    # --- wrapper-side layout plumbing (free reshapes + tiny pads/tiles) ------
    x2 = x_nchw.reshape(G, Nb * Cin, L)                       # free reshape
    x2 = jnp.pad(x2, ((0, 0), (0, 0), (0, Lp - L)))           # few KB, fuses
    dww = jnp.tile(dw_w.reshape(Cin, K * K), (Nb, 1))         # (Nb*Cin, K*K)
    dwb = jnp.tile(dw_b.reshape(Cin, 1), (Nb, 1))             # (Nb*Cin, 1)
    pww = jnp.kron(jnp.eye(Nb, dtype=pw_w.dtype), pw_w)       # (Nb*Cout, Nb*Cin)
    pwb = jnp.tile(pw_b.reshape(Cout, 1), (Nb, 1))            # (Nb*Cout, 1)

    kernel = functools.partial(_dwsc_kernel, K=K, W=W, Lout=Lout)

    out = pl.pallas_call(
        kernel,
        out_shape=jax.ShapeDtypeStruct((G, Nb * Cout, Lout), jnp.float32),
        grid_spec=pltpu.PrefetchScalarGridSpec(
            num_scalar_prefetch=0,
            grid=(G,),
            in_specs=[
                pl.BlockSpec((1, Nb * Cin, Lp), lambda g: (g, 0, 0)),
                pl.BlockSpec((Nb * Cin, K * K), lambda g: (0, 0)),
                pl.BlockSpec((Nb * Cin, 1), lambda g: (0, 0)),
                pl.BlockSpec((Nb * Cout, Nb * Cin), lambda g: (0, 0)),
                pl.BlockSpec((Nb * Cout, 1), lambda g: (0, 0)),
            ],
            out_specs=pl.BlockSpec((1, Nb * Cout, Lout), lambda g: (g, 0, 0)),
        ),
        compiler_params=pltpu.CompilerParams(
            dimension_semantics=("parallel",)),
    )(x2, dww, dwb, pww, pwb)

    # Free reshape to per-batch channel-major, then strip lane padding and the
    # (K-1) invalid tail columns of each spatial row (cheap, fuses in XLA).
    out = out.reshape(N, Cout, Lout)
    out = out[:, :, :H_out * W].reshape(N, Cout, H_out, W)[:, :, :, :W_out]
    return out


def _reference(x_nchw, dw_w, dw_b, pw_w, pw_b):
    """Plain-JAX reference (lax conv) for verification."""
    Cin = x_nchw.shape[1]
    y = jax.lax.conv_general_dilated(
        x_nchw, dw_w[:, None, :, :], window_strides=(1, 1), padding="VALID",
        feature_group_count=Cin,
        dimension_numbers=("NCHW", "OIHW", "NCHW"))
    y = jnp.maximum(y + dw_b[None, :, None, None], 0.0)
    z = jax.lax.conv_general_dilated(
        y, pw_w[:, :, None, None], window_strides=(1, 1), padding="VALID",
        dimension_numbers=("NCHW", "OIHW", "NCHW"))
    z = jnp.maximum(z + pw_b[None, :, None, None], 0.0)
    return z


if __name__ == "__main__":
    # Small shapes consistent with the module: batch=2, in_ch=4, out_ch=8,
    # spatial 16x16, kernel_size=2, stride=1, padding=0.
    N, Cin, H, W = 2, 4, 16, 16
    Cout, K = 8, 2

    key = jax.random.PRNGKey(0)
    kx, k1, k2, k3, k4 = jax.random.split(key, 5)
    x = jax.random.normal(kx, (N, Cin, H, W), dtype=jnp.float32)
    dw_w = jax.random.normal(k1, (Cin, K, K), dtype=jnp.float32) * 0.5
    dw_b = jax.random.normal(k2, (Cin,), dtype=jnp.float32) * 0.1
    pw_w = jax.random.normal(k3, (Cout, Cin), dtype=jnp.float32) * 0.5
    pw_b = jax.random.normal(k4, (Cout,), dtype=jnp.float32) * 0.1

    out = multi_stream_dwsc(x, dw_w, dw_b, pw_w, pw_b, kernel_size=K)
    out = jax.block_until_ready(out)

    ref = _reference(x, dw_w, dw_b, pw_w, pw_b)
    assert out.shape == (N, Cout, H - K + 1, W - K + 1), out.shape
    assert jnp.allclose(out, ref, atol=1e-4, rtol=1e-4), "mismatch vs reference"

    print("KERNEL_OK")
</pallas_src>

<mosaic_0001>
module attributes {stable_mosaic.version = 11 : i64} {
  func.func @_dwsc_kernel(%arg0: i32, %arg1: memref<1x8x384xf32, #tpu.memory_space<vmem>>, %arg2: memref<8x4xf32, #tpu.memory_space<vmem>>, %arg3: memref<8x1xf32, #tpu.memory_space<vmem>>, %arg4: memref<16x8xf32, #tpu.memory_space<vmem>>, %arg5: memref<16x1xf32, #tpu.memory_space<vmem>>, %arg6: memref<1x16x256xf32, #tpu.memory_space<vmem>>) attributes {dimension_semantics = [#tpu.dimension_semantics<parallel>], iteration_bounds = array<i64: 1>, scalar_prefetch = 0 : i64, scratch_operands = 0 : i64, tpu.core_type = #tpu.core_type<tc>, window_params = [{transform_indices = @transform_0, window_bounds = array<i64: 1, 8, 384>}, {pipeline_mode = #tpu.pipeline_mode<synchronous>, transform_indices = @transform_1, window_bounds = array<i64: 8, 4>}, {pipeline_mode = #tpu.pipeline_mode<synchronous>, transform_indices = @transform_2, window_bounds = array<i64: 8, 1>}, {pipeline_mode = #tpu.pipeline_mode<synchronous>, transform_indices = @transform_3, window_bounds = array<i64: 16, 8>}, {pipeline_mode = #tpu.pipeline_mode<synchronous>, transform_indices = @transform_4, window_bounds = array<i64: 16, 1>}, {transform_indices = @transform_5, window_bounds = array<i64: 1, 16, 256>}]} {
    %c0 = arith.constant 0 : index
    %c0_0 = arith.constant 0 : index
    %c0_1 = arith.constant 0 : index
    %0 = vector.load %arg1[%c0, %c0_0, %c0_1] : memref<1x8x384xf32, #tpu.memory_space<vmem>>, vector<1x8x384xf32>
    %1 = vector.shape_cast %0 : vector<1x8x384xf32> to vector<8x384xf32>
    %c0_2 = arith.constant 0 : index
    %c0_3 = arith.constant 0 : index
    %2 = vector.load %arg2[%c0_2, %c0_3] : memref<8x4xf32, #tpu.memory_space<vmem>>, vector<8x4xf32>
    %3 = vector.extract_strided_slice %1 {offsets = [0, 0], sizes = [8, 256], strides = [1, 1]} : vector<8x384xf32> to vector<8x256xf32>
    %4 = vector.extract_strided_slice %2 {offsets = [0, 0], sizes = [8, 1], strides = [1, 1]} : vector<8x4xf32> to vector<8x1xf32>
    %5 = vector.broadcast %4 : vector<8x1xf32> to vector<8x256xf32>
    %6 = arith.mulf %3, %5 : vector<8x256xf32>
    %7 = vector.extract_strided_slice %1 {offsets = [0, 1], sizes = [8, 256], strides = [1, 1]} : vector<8x384xf32> to vector<8x256xf32>
    %8 = vector.extract_strided_slice %2 {offsets = [0, 1], sizes = [8, 1], strides = [1, 1]} : vector<8x4xf32> to vector<8x1xf32>
    %9 = vector.broadcast %8 : vector<8x1xf32> to vector<8x256xf32>
    %10 = arith.mulf %7, %9 : vector<8x256xf32>
    %11 = arith.addf %6, %10 : vector<8x256xf32>
    %12 = vector.extract_strided_slice %1 {offsets = [0, 16], sizes = [8, 256], strides = [1, 1]} : vector<8x384xf32> to vector<8x256xf32>
    %13 = vector.extract_strided_slice %2 {offsets = [0, 2], sizes = [8, 1], strides = [1, 1]} : vector<8x4xf32> to vector<8x1xf32>
    %14 = vector.broadcast %13 : vector<8x1xf32> to vector<8x256xf32>
    %15 = arith.mulf %12, %14 : vector<8x256xf32>
    %16 = arith.addf %11, %15 : vector<8x256xf32>
    %17 = vector.extract_strided_slice %1 {offsets = [0, 17], sizes = [8, 256], strides = [1, 1]} : vector<8x384xf32> to vector<8x256xf32>
    %18 = vector.extract_strided_slice %2 {offsets = [0, 3], sizes = [8, 1], strides = [1, 1]} : vector<8x4xf32> to vector<8x1xf32>
    %19 = vector.broadcast %18 : vector<8x1xf32> to vector<8x256xf32>
    %20 = arith.mulf %17, %19 : vector<8x256xf32>
    %21 = arith.addf %16, %20 : vector<8x256xf32>
    %c0_4 = arith.constant 0 : index
    %c0_5 = arith.constant 0 : index
    %22 = vector.load %arg3[%c0_4, %c0_5] : memref<8x1xf32, #tpu.memory_space<vmem>>, vector<8x1xf32>
    %23 = vector.broadcast %22 : vector<8x1xf32> to vector<8x256xf32>
    %24 = arith.addf %21, %23 : vector<8x256xf32>
    %cst = arith.constant 0.000000e+00 : f32
    %25 = vector.broadcast %cst : f32 to vector<8x256xf32>
    %26 = arith.maximumf %24, %25 : vector<8x256xf32>
    %c0_6 = arith.constant 0 : index
    %c0_7 = arith.constant 0 : index
    %27 = vector.load %arg4[%c0_6, %c0_7] : memref<16x8xf32, #tpu.memory_space<vmem>>, vector<16x8xf32>
    %cst_8 = arith.constant dense<0.000000e+00> : vector<16x256xf32>
    %28 = tpu.matmul %27, %26, %cst_8 {dimension_numbers = #tpu.dot_dimension_numbers<[1], [0], [0], [1], [0, 0, 1, 1], [], []>} : vector<16x8xf32>, vector<8x256xf32>, vector<16x256xf32> -> vector<16x256xf32>
    %c0_9 = arith.constant 0 : index
    %c0_10 = arith.constant 0 : index
    %29 = vector.load %arg5[%c0_9, %c0_10] : memref<16x1xf32, #tpu.memory_space<vmem>>, vector<16x1xf32>
    %30 = vector.broadcast %29 : vector<16x1xf32> to vector<16x256xf32>
    %31 = arith.addf %28, %30 : vector<16x256xf32>
    %cst_11 = arith.constant 0.000000e+00 : f32
    %32 = vector.broadcast %cst_11 : f32 to vector<16x256xf32>
    %33 = arith.maximumf %31, %32 : vector<16x256xf32>
    %c0_12 = arith.constant 0 : index
    %c0_13 = arith.constant 0 : index
    %c0_14 = arith.constant 0 : index
    %34 = vector.load %arg6[%c0_12, %c0_13, %c0_14] : memref<1x16x256xf32, #tpu.memory_space<vmem>>, vector<1x16x256xf32>
    %35 = vector.shape_cast %34 : vector<1x16x256xf32> to vector<16x256xf32>
    %36 = vector.shape_cast %33 : vector<16x256xf32> to vector<1x16x256xf32>
    tpu.vector_store %arg6[%c0_12, %c0_13, %c0_14], %36 {strides = array<i32>} : memref<1x16x256xf32, #tpu.memory_space<vmem>>, vector<1x16x256xf32>,
    return
  }
  func.func @transform_0(%arg0: i32) -> (i32, i32, i32) {
    %c0_i32 = arith.constant 0 : i32
    %c0_i32_0 = arith.constant 0 : i32
    %c0_i32_1 = arith.constant 0 : i32
    return %arg0, %c0_i32, %c0_i32_0 : i32, i32, i32
  }
  func.func @transform_1(%arg0: i32) -> (i32, i32) {
    %c0_i32 = arith.constant 0 : i32
    %c0_i32_0 = arith.constant 0 : i32
    %c0_i32_1 = arith.constant 0 : i32
    return %c0_i32, %c0_i32_0 : i32, i32
  }
  func.func @transform_2(%arg0: i32) -> (i32, i32) {
    %c0_i32 = arith.constant 0 : i32
    %c0_i32_0 = arith.constant 0 : i32
    %c0_i32_1 = arith.constant 0 : i32
    return %c0_i32, %c0_i32_0 : i32, i32
  }
  func.func @transform_3(%arg0: i32) -> (i32, i32) {
    %c0_i32 = arith.constant 0 : i32
    %c0_i32_0 = arith.constant 0 : i32
    %c0_i32_1 = arith.constant 0 : i32
    return %c0_i32, %c0_i32_0 : i32, i32
  }
  func.func @transform_4(%arg0: i32) -> (i32, i32) {
    %c0_i32 = arith.constant 0 : i32
    %c0_i32_0 = arith.constant 0 : i32
    %c0_i32_1 = arith.constant 0 : i32
    return %c0_i32, %c0_i32_0 : i32, i32
  }
  func.func @transform_5(%arg0: i32) -> (i32, i32, i32) {
    %c0_i32 = arith.constant 0 : i32
    %c0_i32_0 = arith.constant 0 : i32
    %c0_i32_1 = arith.constant 0 : i32
    return %arg0, %c0_i32, %c0_i32_0 : i32, i32, i32
  }
}

</mosaic_0001>

<llo_original>
// kernel: tpu_custom_call.1
$region0: #{tpu_custom_call.1}
  #allocation0 [shape = 'u32[]', space=smem, size = 0x4, offset = 0x4, fixed_abs, tag = 'smem constant byte address 0x4 - core index']
  #allocation1 [shape = 'u32[72,128]{1,0:T(1,128)}', space=vmem, size = 0x9000, scoped, tag = 'internal scratch']
  %s0 = inlined_call_operand.vmem [shape: f32[1,8,384], index: 0, kind: input, shape index: {}]
  %s1 = inlined_call_operand.vmem [shape: f32[8,4], index: 1, kind: input, shape index: {}]
  %s2 = inlined_call_operand.vmem [shape: f32[8,1], index: 2, kind: input, shape index: {}]
  %s3 = inlined_call_operand.vmem [shape: f32[16,8], index: 3, kind: input, shape index: {}]
  %s4 = inlined_call_operand.vmem [shape: f32[16,1], index: 4, kind: input, shape index: {}]
  %s5 = inlined_call_operand.hbm [shape: f32[1,16,256], index: 5, kind: output, shape index: {}]
  %s6 = sld [smem:[#allocation0]]
  $region30: #{tpu_custom_call.1} parent=0
    _
  %s8 = ssub.s32 1, %s6
  %s9 = scalar_select 0, %s8, %s6
  $region1: #{tpu_custom_call.1} parent=0
    #allocation2 [shape = 'u8[16384]{0}', space=vmem, size = 0x4000, scoped, tag = 'output window, operand 0, single buffered']
    #allocation3 [shape = 's32[1]{0}', space=sflag, size = 0x4, scoped, tag = 'scoped memory for tpu_custom_call.1']
    %10 = vsyncpa [#allocation3], 0
    // Predicated region
    $region2: #{tpu_custom_call.1} parent=1 // pred_check
      _
    $region3: #{tpu_custom_call.1} parent=1 // pred_check_branch
      %12 = sbr.rel (0) target = $region5
    $region4: #{tpu_custom_call.1} parent=1 // pred_region
      _
    $region5: #{tpu_custom_call.1} parent=1 // pred_fallthru
      _
    // Predicated region
    $region6: #{tpu_custom_call.1} parent=1 // pred_check
      _
    $region7: #{tpu_custom_call.1} parent=1 // pred_check_branch
      %14 = sbr.rel (0) target = $region9
    $region8: #{tpu_custom_call.1} parent=1 // pred_region
      _
    $region9: #{tpu_custom_call.1} parent=1 // pred_fallthru
      _
    // Predicated region
    $region10: #{tpu_custom_call.1} parent=1 // pred_check
      _
    $region11: #{tpu_custom_call.1} parent=1 // pred_check_branch
      %16 = sbr.rel (0) target = $region13
    $region12: #{tpu_custom_call.1} parent=1 // pred_region
      _
    $region13: #{tpu_custom_call.1} parent=1 // pred_fallthru
      _
    // Predicated region
    $region14: #{tpu_custom_call.1} parent=1 // pred_check
      _
    $region15: #{tpu_custom_call.1} parent=1 // pred_check_branch
      %18 = sbr.rel (0) target = $region17
    $region16: #{tpu_custom_call.1} parent=1 // pred_region
      _
    $region17: #{tpu_custom_call.1} parent=1 // pred_fallthru
      _
    // Predicated region
    $region18: #{tpu_custom_call.1} parent=1 // pred_check
      _
    $region19: #{tpu_custom_call.1} parent=1 // pred_check_branch
      %20 = sbr.rel (0) target = $region21
    $region20: #{tpu_custom_call.1} parent=1 // pred_region
      _
    $region21: #{tpu_custom_call.1} parent=1 // pred_fallthru
      _
    %v21 = vld [vmem:[%s0] sm:$0xff]
    %v22 = vld [vmem:[%s0 + $0x8] sm:$0xff]
    %v23 = vld [vmem:[%s0 + $0x10] sm:$0xff]
    %v24 = vld [vmem:[%s1] sm:$0xff]
    %26 = vset.pattern.permute.xlu0 0
    %27 = vperm.xlu0 %26, %v24
    %v28 = vpop.permute.xlu0 %27
    %v30 = vmul.f32 %v21, %v28
    %v31 = vmul.f32 %v22, %v28
    %32 = vset.pattern.permute.xlu0 1
    %33 = vperm.xlu0 %32, %v24
    %v34 = vpop.permute.xlu0 %33
    %v36 = vmul.f32 %v21, %v34
    %v37 = vmul.f32 %v22, %v34
    %v38 = vmul.f32 %v23, %v34
    %42 = vrot.lane.b32.xlu0 %v36, 127
    %v43 = vpop.permute.xlu0 %42
    %44 = vrot.lane.b32.xlu0 %v37, 127
    %v45 = vpop.permute.xlu0 %44
    %46 = vrot.lane.b32.xlu0 %v38, 127
    %v47 = vpop.permute.xlu0 %46
    %vm48 = vcmask 1039360
    %v49 = vsel %vm48, %v43, %v45
    %v50 = vsel %vm48, %v45, %v47
    %v53 = vadd.f32 %v30, %v49
    %v54 = vadd.f32 %v31, %v50
    %55 = vset.pattern.permute.xlu0 2
    %56 = vperm.xlu0 %55, %v24
    %v57 = vpop.permute.xlu0 %56
    %v59 = vmul.f32 %v21, %v57
    %v60 = vmul.f32 %v22, %v57
    %v61 = vmul.f32 %v23, %v57
    %65 = vrot.lane.b32.xlu0 %v59, 112
    %v66 = vpop.permute.xlu0 %65
    %67 = vrot.lane.b32.xlu0 %v60, 112
    %v68 = vpop.permute.xlu0 %67
    %69 = vrot.lane.b32.xlu0 %v61, 112
    %v70 = vpop.permute.xlu0 %69
    %vm71 = vcmask 916480
    %v72 = vsel %vm71, %v66, %v68
    %v73 = vsel %vm71, %v68, %v70
    %v76 = vadd.f32 %v53, %v72
    %v77 = vadd.f32 %v54, %v73
    %78 = vset.pattern.permute.xlu0 3
    %79 = vperm.xlu0 %78, %v24
    %v80 = vpop.permute.xlu0 %79
    %v82 = vmul.f32 %v21, %v80
    %v83 = vmul.f32 %v22, %v80
    %v84 = vmul.f32 %v23, %v80
    %88 = vrot.lane.b32.xlu0 %v82, 111
    %v89 = vpop.permute.xlu0 %88
    %90 = vrot.lane.b32.xlu0 %v83, 111
    %v91 = vpop.permute.xlu0 %90
    %92 = vrot.lane.b32.xlu0 %v84, 111
    %v93 = vpop.permute.xlu0 %92
    %vm94 = vcmask 908288
    %v95 = vsel %vm94, %v89, %v91
    %v96 = vsel %vm94, %v91, %v93
    %v99 = vadd.f32 %v76, %v95
    %v100 = vadd.f32 %v77, %v96
    %v101 = vld [vmem:[%s2] sm:$0xff]
    %103 = vset.pattern.permute.xlu0 0
    %104 = vperm.xlu0 %103, %v101
    %v105 = vpop.permute.xlu0 %104
    %v107 = vadd.f32 %v99, %v105
    %v108 = vadd.f32 %v100, %v105
    %v109 = vmax.f32 %v107, 0.0
    %v110 = vmax.f32 %v108, 0.0
    %v111 = vld [vmem:[%s3] sm:$0xff]
    %v112 = vld [vmem:[%s3 + $0x8] sm:$0xff]
    %v113 = vld [vmem:[%s4] sm:$0xff]
    %v114 = vld [vmem:[%s4 + $0x8] sm:$0xff]
    %116 = vset.pattern.permute.xlu0 0
    %117 = vperm.xlu0 %116, %v113
    %v118 = vpop.permute.xlu0 %117
    %121 = vset.pattern.permute.xlu0 0
    %122 = vperm.xlu0 %121, %v114
    %v123 = vpop.permute.xlu0 %122
    %vm125 = vcmask 64512
    %v127 = vsel %vm125, %v111, 0
    %v130 = vsel %vm125, %v112, 0
    %132 = vmatpush.msra.mxu0 0.0
    %133 = vmatpush.msra.mxu0 0.0
    %134 = vmatpush.msra.mxu0 0.0
    %135 = vmatpush.msra.mxu0 0.0
    %136 = vmatpush.msra.mxu0 0.0
    %137 = vmatpush.msra.mxu0 0.0
    %138 = vmatpush.msra.mxu0 0.0
    %139 = vmatpush.msra.mxu0 0.0
    %140 = vmatpush.msra.mxu0 0.0
    %141 = vmatpush.msra.mxu0 0.0
    %142 = vmatpush.msra.mxu0 0.0
    %143 = vmatpush.msra.mxu0 0.0
    %144 = vmatpush.msra.mxu0 0.0
    %145 = vmatpush.msra.mxu0 0.0
    %146 = vmatpush.msra.mxu0 0.0
    %147 = vmatpush.msra.mxu0 %v109
    %148 = vmatmul.f32.gmra.mxu0 %v127
    %v149 = vpop.f32.mrf.mxu0
    %v150 = vadd.f32 %v118, %v149
    %151 = vmatmul.f32.gmra.mxu0 %v130
    %v152 = vpop.f32.mrf.mxu0
    %v153 = vadd.f32 %v123, %v152
    %154 = vdwg.mxu0
    %155 = vmatpush.msra.mxu0 0.0
    %156 = vmatpush.msra.mxu0 0.0
    %157 = vmatpush.msra.mxu0 0.0
    %158 = vmatpush.msra.mxu0 0.0
    %159 = vmatpush.msra.mxu0 0.0
    %160 = vmatpush.msra.mxu0 0.0
    %161 = vmatpush.msra.mxu0 0.0
    %162 = vmatpush.msra.mxu0 0.0
    %163 = vmatpush.msra.mxu0 0.0
    %164 = vmatpush.msra.mxu0 0.0
    %165 = vmatpush.msra.mxu0 0.0
    %166 = vmatpush.msra.mxu0 0.0
    %167 = vmatpush.msra.mxu0 0.0
    %168 = vmatpush.msra.mxu0 0.0
    %169 = vmatpush.msra.mxu0 0.0
    %170 = vmatpush.msra.mxu0 %v110
    %171 = vmatmul.f32.gmra.mxu0 %v127
    %v172 = vpop.f32.mrf.mxu0
    %v173 = vadd.f32 %v118, %v172
    %174 = vmatmul.f32.gmra.mxu0 %v130
    %v175 = vpop.f32.mrf.mxu0
    %v176 = vadd.f32 %v123, %v175
    %177 = vdwg.mxu0
    %v178 = vmax.f32 %v150, 0.0
    %v179 = vmax.f32 %v173, 0.0
    %v180 = vmax.f32 %v153, 0.0
    %v181 = vmax.f32 %v176, 0.0
    %182 = vst [vmem:[#allocation2] sm:$0xff] %v178
    %183 = vst [vmem:[#allocation2 + $0x8] sm:$0xff] %v179
    %184 = vst [vmem:[#allocation2 + $0x10] sm:$0xff] %v180
    %185 = vst [vmem:[#allocation2 + $0x18] sm:$0xff] %v181
    // Predicated region
    $region22: #{tpu_custom_call.1} parent=1 // pred_check
      _
    $region23: #{tpu_custom_call.1} parent=1 // pred_check_branch
      %187 = sbr.rel (0) target = $region25
    $region24: #{tpu_custom_call.1} parent=1 // pred_region
      %189 = vsyncadd [#allocation3], 0
      %s190 = sshll.u32 [#allocation2], 4
      %s191 = int_to_ptr.vmem [resolvable:$true] %s190
      %s192 = sshll.u32 %s5, 4
      %s193 = int_to_ptr.hbm [resolvable:$true] %s192
      %198 = dma.vmem_to_hbm [thread:$0]  %s191, 512, %s193, [#allocation3], 256, 256, 16
    $region25: #{tpu_custom_call.1} parent=1 // pred_fallthru
      _
    // Predicated region
    $region26: #{tpu_custom_call.1} parent=1 // pred_check
      _
    $region27: #{tpu_custom_call.1} parent=1 // pred_check_branch
      %200 = sbr.rel (0) target = $region29
    $region28: #{tpu_custom_call.1} parent=1 // pred_region
      %202 = dma.done [#allocation3], 512
    $region29: #{tpu_custom_call.1} parent=1 // pred_fallthru
      _
    %203 = vsyncpa [#allocation3], 1

</llo_original>
